<compile_context>
chip_gen: v6e
topology: v6e:2x2x1
jax: 0.10.0
libtpu: 0.0.40
codegen_flags: <defaults>
</compile_context>

<pallas_src>
import functools

import jax
import jax.numpy as jnp
from jax.experimental import pallas as pl
from jax.experimental.pallas import tpu as pltpu

HIDDE_SIZE_OUT = 8   # module-level constant in the PyTorch file
LANE = 128           # TPU lane width; the parameter slab is lane-padded to this


# --------------------------------------------------------------------------
# Parameter packing: one [R, 128] f32 slab, blocks at 8-aligned row offsets
# --------------------------------------------------------------------------
def _round_up(n, m):
    return (n + m - 1) // m * m


def _pack_rows(blocks):
    """Stack 2-D f32 blocks into one [R, 128] slab.

    Each block b lives at rows offsets[i] : offsets[i]+b.shape[0],
    lanes 0 : b.shape[1].  Row offsets are 8-aligned (sublane tile aligned).
    """
    offsets = []
    row = 0
    for b in blocks:
        offsets.append(row)
        row += _round_up(b.shape[0], 8)
    slab = jnp.zeros((_round_up(row, 8), LANE), jnp.float32)
    for off, b in zip(offsets, blocks):
        slab = slab.at[off:off + b.shape[0], 0:b.shape[1]].set(
            b.astype(jnp.float32))
    return slab, tuple(offsets)


# --------------------------------------------------------------------------
# Kernels
# --------------------------------------------------------------------------
def _make_discr_kernel(out_size, hidde_size, discr_size, offs):
    H = hidde_size
    o_w1, o_b1, o_w2, o_b2, o_ewo, o_wo, o_bo = offs

    def kernel(x_ref, p_ref, out_ref):
        x = x_ref[...]                                   # [B, state_size]
        c0 = x[:, 0:1]                                   # conti_x[:, 0]
        c1 = x[:, 1:2]                                   # conti_x[:, 1]
        idx = x[:, 2:3].astype(jnp.int32)                # discr_x (.long())

        # Linear(2,H) -> ReLU : K=2 contraction as VPU broadcast FMAs.
        w1 = p_ref[o_w1:o_w1 + 2, 0:H]                   # [2, H]
        b1 = p_ref[o_b1:o_b1 + 1, 0:H]                   # [1, H]
        h = jnp.maximum(c0 * w1[0:1, :] + c1 * w1[1:2, :] + b1, 0.0)   # [B, H]

        # Linear(H,8) : the only MXU matmul (K=32).
        w2 = p_ref[o_w2:o_w2 + H, 0:HIDDE_SIZE_OUT]      # [H, 8]
        b2 = p_ref[o_b2:o_b2 + 1, 0:HIDDE_SIZE_OUT]      # [1, 8]
        h2 = jnp.dot(h, w2, preferred_element_type=jnp.float32) + b2   # [B, 8]

        # Output layer + embedding folded through it:
        #   sigmoid((h2 + e) @ wo + bo) == sigmoid(h2 @ wo + e @ wo + bo)
        # h2 @ wo (K=8) unrolled as VPU FMAs; e @ wo is the precomputed emb_wo row.
        wo = p_ref[o_wo:o_wo + HIDDE_SIZE_OUT, 0:out_size]       # [8, out]
        bo = p_ref[o_bo:o_bo + 1, 0:out_size]                    # [1, out]
        ewo = p_ref[o_ewo:o_ewo + discr_size, 0:out_size]        # [D, out]

        logits = h2[:, 0:1] * wo[0:1, :] + bo
        for k in range(1, HIDDE_SIZE_OUT):
            logits = logits + h2[:, k:k + 1] * wo[k:k + 1, :]
        for d in range(discr_size):
            logits = logits + jnp.where(idx == d, 1.0, 0.0) * ewo[d:d + 1, :]

        out_ref[...] = jax.nn.sigmoid(logits)

    return kernel


def _make_conti_kernel(out_size, hidde_size, offs):
    H = hidde_size
    o_w1, o_b1, o_w2, o_b2 = offs

    def kernel(x_ref, p_ref, out_ref):
        x = x_ref[...]                                   # [B, state_size]
        c0 = x[:, 0:1]
        c1 = x[:, 1:2]

        w1 = p_ref[o_w1:o_w1 + 2, 0:H]                   # [2, H]
        b1 = p_ref[o_b1:o_b1 + 1, 0:H]                   # [1, H]
        h = jnp.maximum(c0 * w1[0:1, :] + c1 * w1[1:2, :] + b1, 0.0)   # [B, H]

        w2 = p_ref[o_w2:o_w2 + H, 0:out_size]            # [H, out]
        b2 = p_ref[o_b2:o_b2 + 1, 0:out_size]            # [1, out]
        # output_activation == 'None' -> identity
        out_ref[...] = jnp.dot(h, w2, preferred_element_type=jnp.float32) + b2

    return kernel


# --------------------------------------------------------------------------
# Wrappers (single ungridded pallas_call, everything resident in VMEM)
# --------------------------------------------------------------------------
_VMEM_SPEC = pl.BlockSpec(memory_space=pltpu.MemorySpace.VMEM)


@functools.partial(
    jax.jit,
    static_argnames=("out_size", "hidde_size", "discr_size", "offsets"))
def actor_forward_discrete(x, slab, *, out_size, hidde_size, discr_size, offsets):
    B = x.shape[0]
    kernel = _make_discr_kernel(out_size, hidde_size, discr_size, offsets)
    return pl.pallas_call(
        kernel,
        out_shape=jax.ShapeDtypeStruct((B, out_size), jnp.float32),
        in_specs=[_VMEM_SPEC, _VMEM_SPEC],
        out_specs=_VMEM_SPEC,
    )(x, slab)


@functools.partial(
    jax.jit, static_argnames=("out_size", "hidde_size", "offsets"))
def actor_forward_continuous(x, slab, *, out_size, hidde_size, offsets):
    B = x.shape[0]
    kernel = _make_conti_kernel(out_size, hidde_size, offsets)
    return pl.pallas_call(
        kernel,
        out_shape=jax.ShapeDtypeStruct((B, out_size), jnp.float32),
        in_specs=[_VMEM_SPEC, _VMEM_SPEC],
        out_specs=_VMEM_SPEC,
    )(x, slab)


# --------------------------------------------------------------------------
# Parameter init (torch.nn.Linear-style uniform bounds) + packing
# --------------------------------------------------------------------------
def _linear(kw, kb, fan_in, fan_out):
    bound = 1.0 / (fan_in ** 0.5)
    w = jax.random.uniform(kw, (fan_in, fan_out), jnp.float32, -bound, bound)
    b = jax.random.uniform(kb, (1, fan_out), jnp.float32, -bound, bound)
    return w, b


def init_discrete_params(key, *, out_size, hidde_size, discr_size):
    ks = jax.random.split(key, 7)
    w1, b1 = _linear(ks[0], ks[1], 2, hidde_size)                 # make_seq L1
    w2, b2 = _linear(ks[2], ks[3], hidde_size, HIDDE_SIZE_OUT)    # make_seq L2
    emb = jax.random.normal(ks[4], (discr_size, HIDDE_SIZE_OUT), jnp.float32)
    wo, bo = _linear(ks[5], ks[6], HIDDE_SIZE_OUT, out_size)      # output_layer
    return dict(w1=w1, b1=b1, w2=w2, b2=b2, emb=emb, wo=wo, bo=bo)


def pack_discrete_params(p):
    emb_wo = p["emb"] @ p["wo"]   # fold embedding through output layer (one-time)
    return _pack_rows([p["w1"], p["b1"], p["w2"], p["b2"], emb_wo, p["wo"], p["bo"]])


def init_continuous_params(key, *, out_size, hidde_size):
    ks = jax.random.split(key, 4)
    w1, b1 = _linear(ks[0], ks[1], 2, hidde_size)
    w2, b2 = _linear(ks[2], ks[3], hidde_size, out_size)   # final layer -> out_size
    return dict(w1=w1, b1=b1, w2=w2, b2=b2)


def pack_continuous_params(p):
    return _pack_rows([p["w1"], p["b1"], p["w2"], p["b2"]])


# --------------------------------------------------------------------------
# Pure-JAX references (mirror the PyTorch forward)
# --------------------------------------------------------------------------
def reference_discrete(x, p):
    conti = x[:, 0:2]
    idx = x[:, 2].astype(jnp.int32)
    h = jnp.maximum(conti @ p["w1"] + p["b1"], 0.0)
    h2 = h @ p["w2"] + p["b2"]
    e = p["emb"][idx]
    return jax.nn.sigmoid((h2 + e) @ p["wo"] + p["bo"])


def reference_continuous(x, p):
    conti = x[:, 0:2]
    h = jnp.maximum(conti @ p["w1"] + p["b1"], 0.0)
    return h @ p["w2"] + p["b2"]   # output_activation == 'None'


if __name__ == "__main__":
    key = jax.random.PRNGKey(0)
    B, state_size, out_size, hidde_size, discr_size = 8, 3, 2, 32, 5

    k_x, k_idx, k_p, k_p2 = jax.random.split(key, 4)
    conti_part = jax.random.normal(k_x, (B, 2), jnp.float32)
    idx_part = jax.random.randint(k_idx, (B, 1), 0, discr_size).astype(jnp.float32)
    x = jnp.concatenate([conti_part, idx_part], axis=1)    # [B, state_size]

    # ---- discrete-state ActorNet ----
    p_d = init_discrete_params(k_p, out_size=out_size, hidde_size=hidde_size,
                               discr_size=discr_size)
    slab_d, offs_d = pack_discrete_params(p_d)
    out_d = actor_forward_discrete(x, slab_d, out_size=out_size,
                                   hidde_size=hidde_size, discr_size=discr_size,
                                   offsets=offs_d)
    jax.block_until_ready(out_d)
    ref_d = reference_discrete(x, p_d)
    assert out_d.shape == (B, out_size)
    assert jnp.allclose(out_d, ref_d, atol=1e-5, rtol=1e-5), "discrete branch mismatch"

    # ---- continuous-state ActorNet (same class, is_discr_state=False) ----
    p_c = init_continuous_params(k_p2, out_size=out_size, hidde_size=hidde_size)
    slab_c, offs_c = pack_continuous_params(p_c)
    out_c = actor_forward_continuous(x, slab_c, out_size=out_size,
                                     hidde_size=hidde_size, offsets=offs_c)
    jax.block_until_ready(out_c)
    ref_c = reference_continuous(x, p_c)
    assert out_c.shape == (B, out_size)
    assert jnp.allclose(out_c, ref_c, atol=1e-5, rtol=1e-5), "continuous branch mismatch"

    print("KERNEL_OK")
</pallas_src>

<mosaic_0001>
module attributes {stable_mosaic.version = 11 : i64} {
  func.func @kernel(%arg0: memref<8x3xf32, #tpu.memory_space<vmem>>, %arg1: memref<80x128xf32, #tpu.memory_space<vmem>>, %arg2: memref<8x2xf32, #tpu.memory_space<vmem>>) attributes {dimension_semantics = [], scalar_prefetch = 0 : i64, scratch_operands = 0 : i64, tpu.core_type = #tpu.core_type<tc>} {
    %c0 = arith.constant 0 : index
    %c0_0 = arith.constant 0 : index
    %0 = vector.load %arg0[%c0, %c0_0] : memref<8x3xf32, #tpu.memory_space<vmem>>, vector<8x3xf32>
    %1 = vector.extract_strided_slice %0 {offsets = [0, 0], sizes = [8, 1], strides = [1, 1]} : vector<8x3xf32> to vector<8x1xf32>
    %2 = vector.extract_strided_slice %0 {offsets = [0, 1], sizes = [8, 1], strides = [1, 1]} : vector<8x3xf32> to vector<8x1xf32>
    %3 = vector.extract_strided_slice %0 {offsets = [0, 2], sizes = [8, 1], strides = [1, 1]} : vector<8x3xf32> to vector<8x1xf32>
    %4 = arith.fptosi %3 : vector<8x1xf32> to vector<8x1xi32>
    %c0_1 = arith.constant 0 : index
    %c0_2 = arith.constant 0 : index
    %5 = vector.load %arg1[%c0_1, %c0_2] : memref<80x128xf32, #tpu.memory_space<vmem>>, vector<2x32xf32>
    %c8 = arith.constant 8 : index
    %c0_3 = arith.constant 0 : index
    %6 = vector.load %arg1[%c8, %c0_3] : memref<80x128xf32, #tpu.memory_space<vmem>>, vector<1x32xf32>
    %7 = vector.extract_strided_slice %5 {offsets = [0, 0], sizes = [1, 32], strides = [1, 1]} : vector<2x32xf32> to vector<1x32xf32>
    %8 = vector.broadcast %1 : vector<8x1xf32> to vector<8x32xf32>
    %9 = vector.broadcast %7 : vector<1x32xf32> to vector<8x32xf32>
    %10 = arith.mulf %8, %9 : vector<8x32xf32>
    %11 = vector.extract_strided_slice %5 {offsets = [1, 0], sizes = [1, 32], strides = [1, 1]} : vector<2x32xf32> to vector<1x32xf32>
    %12 = vector.broadcast %2 : vector<8x1xf32> to vector<8x32xf32>
    %13 = vector.broadcast %11 : vector<1x32xf32> to vector<8x32xf32>
    %14 = arith.mulf %12, %13 : vector<8x32xf32>
    %15 = arith.addf %10, %14 : vector<8x32xf32>
    %16 = vector.broadcast %6 : vector<1x32xf32> to vector<8x32xf32>
    %17 = arith.addf %15, %16 : vector<8x32xf32>
    %cst = arith.constant 0.000000e+00 : f32
    %18 = vector.broadcast %cst : f32 to vector<8x32xf32>
    %19 = arith.maximumf %17, %18 : vector<8x32xf32>
    %c16 = arith.constant 16 : index
    %c0_4 = arith.constant 0 : index
    %20 = vector.load %arg1[%c16, %c0_4] : memref<80x128xf32, #tpu.memory_space<vmem>>, vector<32x8xf32>
    %c48 = arith.constant 48 : index
    %c0_5 = arith.constant 0 : index
    %21 = vector.load %arg1[%c48, %c0_5] : memref<80x128xf32, #tpu.memory_space<vmem>>, vector<1x8xf32>
    %cst_6 = arith.constant dense<0.000000e+00> : vector<8x8xf32>
    %22 = tpu.matmul %19, %20, %cst_6 {dimension_numbers = #tpu.dot_dimension_numbers<[1], [0], [0], [1], [0, 0, 1, 1], [], []>} : vector<8x32xf32>, vector<32x8xf32>, vector<8x8xf32> -> vector<8x8xf32>
    %23 = vector.broadcast %21 : vector<1x8xf32> to vector<8x8xf32>
    %24 = arith.addf %22, %23 : vector<8x8xf32>
    %c64 = arith.constant 64 : index
    %c0_7 = arith.constant 0 : index
    %25 = vector.load %arg1[%c64, %c0_7] : memref<80x128xf32, #tpu.memory_space<vmem>>, vector<8x2xf32>
    %c72 = arith.constant 72 : index
    %c0_8 = arith.constant 0 : index
    %26 = vector.load %arg1[%c72, %c0_8] : memref<80x128xf32, #tpu.memory_space<vmem>>, vector<1x2xf32>
    %c56 = arith.constant 56 : index
    %c0_9 = arith.constant 0 : index
    %27 = vector.load %arg1[%c56, %c0_9] : memref<80x128xf32, #tpu.memory_space<vmem>>, vector<5x2xf32>
    %28 = vector.extract_strided_slice %24 {offsets = [0, 0], sizes = [8, 1], strides = [1, 1]} : vector<8x8xf32> to vector<8x1xf32>
    %29 = vector.extract_strided_slice %25 {offsets = [0, 0], sizes = [1, 2], strides = [1, 1]} : vector<8x2xf32> to vector<1x2xf32>
    %30 = vector.broadcast %28 : vector<8x1xf32> to vector<8x2xf32>
    %31 = vector.broadcast %29 : vector<1x2xf32> to vector<8x2xf32>
    %32 = arith.mulf %30, %31 : vector<8x2xf32>
    %33 = vector.broadcast %26 : vector<1x2xf32> to vector<8x2xf32>
    %34 = arith.addf %32, %33 : vector<8x2xf32>
    %35 = vector.extract_strided_slice %24 {offsets = [0, 1], sizes = [8, 1], strides = [1, 1]} : vector<8x8xf32> to vector<8x1xf32>
    %36 = vector.extract_strided_slice %25 {offsets = [1, 0], sizes = [1, 2], strides = [1, 1]} : vector<8x2xf32> to vector<1x2xf32>
    %37 = vector.broadcast %35 : vector<8x1xf32> to vector<8x2xf32>
    %38 = vector.broadcast %36 : vector<1x2xf32> to vector<8x2xf32>
    %39 = arith.mulf %37, %38 : vector<8x2xf32>
    %40 = arith.addf %34, %39 : vector<8x2xf32>
    %41 = vector.extract_strided_slice %24 {offsets = [0, 2], sizes = [8, 1], strides = [1, 1]} : vector<8x8xf32> to vector<8x1xf32>
    %42 = vector.extract_strided_slice %25 {offsets = [2, 0], sizes = [1, 2], strides = [1, 1]} : vector<8x2xf32> to vector<1x2xf32>
    %43 = vector.broadcast %41 : vector<8x1xf32> to vector<8x2xf32>
    %44 = vector.broadcast %42 : vector<1x2xf32> to vector<8x2xf32>
    %45 = arith.mulf %43, %44 : vector<8x2xf32>
    %46 = arith.addf %40, %45 : vector<8x2xf32>
    %47 = vector.extract_strided_slice %24 {offsets = [0, 3], sizes = [8, 1], strides = [1, 1]} : vector<8x8xf32> to vector<8x1xf32>
    %48 = vector.extract_strided_slice %25 {offsets = [3, 0], sizes = [1, 2], strides = [1, 1]} : vector<8x2xf32> to vector<1x2xf32>
    %49 = vector.broadcast %47 : vector<8x1xf32> to vector<8x2xf32>
    %50 = vector.broadcast %48 : vector<1x2xf32> to vector<8x2xf32>
    %51 = arith.mulf %49, %50 : vector<8x2xf32>
    %52 = arith.addf %46, %51 : vector<8x2xf32>
    %53 = vector.extract_strided_slice %24 {offsets = [0, 4], sizes = [8, 1], strides = [1, 1]} : vector<8x8xf32> to vector<8x1xf32>
    %54 = vector.extract_strided_slice %25 {offsets = [4, 0], sizes = [1, 2], strides = [1, 1]} : vector<8x2xf32> to vector<1x2xf32>
    %55 = vector.broadcast %53 : vector<8x1xf32> to vector<8x2xf32>
    %56 = vector.broadcast %54 : vector<1x2xf32> to vector<8x2xf32>
    %57 = arith.mulf %55, %56 : vector<8x2xf32>
    %58 = arith.addf %52, %57 : vector<8x2xf32>
    %59 = vector.extract_strided_slice %24 {offsets = [0, 5], sizes = [8, 1], strides = [1, 1]} : vector<8x8xf32> to vector<8x1xf32>
    %60 = vector.extract_strided_slice %25 {offsets = [5, 0], sizes = [1, 2], strides = [1, 1]} : vector<8x2xf32> to vector<1x2xf32>
    %61 = vector.broadcast %59 : vector<8x1xf32> to vector<8x2xf32>
    %62 = vector.broadcast %60 : vector<1x2xf32> to vector<8x2xf32>
    %63 = arith.mulf %61, %62 : vector<8x2xf32>
    %64 = arith.addf %58, %63 : vector<8x2xf32>
    %65 = vector.extract_strided_slice %24 {offsets = [0, 6], sizes = [8, 1], strides = [1, 1]} : vector<8x8xf32> to vector<8x1xf32>
    %66 = vector.extract_strided_slice %25 {offsets = [6, 0], sizes = [1, 2], strides = [1, 1]} : vector<8x2xf32> to vector<1x2xf32>
    %67 = vector.broadcast %65 : vector<8x1xf32> to vector<8x2xf32>
    %68 = vector.broadcast %66 : vector<1x2xf32> to vector<8x2xf32>
    %69 = arith.mulf %67, %68 : vector<8x2xf32>
    %70 = arith.addf %64, %69 : vector<8x2xf32>
    %71 = vector.extract_strided_slice %24 {offsets = [0, 7], sizes = [8, 1], strides = [1, 1]} : vector<8x8xf32> to vector<8x1xf32>
    %72 = vector.extract_strided_slice %25 {offsets = [7, 0], sizes = [1, 2], strides = [1, 1]} : vector<8x2xf32> to vector<1x2xf32>
    %73 = vector.broadcast %71 : vector<8x1xf32> to vector<8x2xf32>
    %74 = vector.broadcast %72 : vector<1x2xf32> to vector<8x2xf32>
    %75 = arith.mulf %73, %74 : vector<8x2xf32>
    %76 = arith.addf %70, %75 : vector<8x2xf32>
    %c0_i32 = arith.constant 0 : i32
    %77 = vector.broadcast %c0_i32 : i32 to vector<8x1xi32>
    %78 = arith.cmpi eq, %4, %77 : vector<8x1xi32>
    %cst_10 = arith.constant 1.000000e+00 : f32
    %cst_11 = arith.constant 0.000000e+00 : f32
    %79 = vector.broadcast %cst_10 : f32 to vector<8x1xf32>
    %80 = vector.broadcast %cst_11 : f32 to vector<8x1xf32>
    %81 = arith.select %78, %79, %80 : vector<8x1xi1>, vector<8x1xf32>
    %82 = vector.extract_strided_slice %27 {offsets = [0, 0], sizes = [1, 2], strides = [1, 1]} : vector<5x2xf32> to vector<1x2xf32>
    %83 = vector.broadcast %81 : vector<8x1xf32> to vector<8x2xf32>
    %84 = vector.broadcast %82 : vector<1x2xf32> to vector<8x2xf32>
    %85 = arith.mulf %83, %84 : vector<8x2xf32>
    %86 = arith.addf %76, %85 : vector<8x2xf32>
    %c1_i32 = arith.constant 1 : i32
    %87 = vector.broadcast %c1_i32 : i32 to vector<8x1xi32>
    %88 = arith.cmpi eq, %4, %87 : vector<8x1xi32>
    %cst_12 = arith.constant 1.000000e+00 : f32
    %cst_13 = arith.constant 0.000000e+00 : f32
    %89 = vector.broadcast %cst_12 : f32 to vector<8x1xf32>
    %90 = vector.broadcast %cst_13 : f32 to vector<8x1xf32>
    %91 = arith.select %88, %89, %90 : vector<8x1xi1>, vector<8x1xf32>
    %92 = vector.extract_strided_slice %27 {offsets = [1, 0], sizes = [1, 2], strides = [1, 1]} : vector<5x2xf32> to vector<1x2xf32>
    %93 = vector.broadcast %91 : vector<8x1xf32> to vector<8x2xf32>
    %94 = vector.broadcast %92 : vector<1x2xf32> to vector<8x2xf32>
    %95 = arith.mulf %93, %94 : vector<8x2xf32>
    %96 = arith.addf %86, %95 : vector<8x2xf32>
    %c2_i32 = arith.constant 2 : i32
    %97 = vector.broadcast %c2_i32 : i32 to vector<8x1xi32>
    %98 = arith.cmpi eq, %4, %97 : vector<8x1xi32>
    %cst_14 = arith.constant 1.000000e+00 : f32
    %cst_15 = arith.constant 0.000000e+00 : f32
    %99 = vector.broadcast %cst_14 : f32 to vector<8x1xf32>
    %100 = vector.broadcast %cst_15 : f32 to vector<8x1xf32>
    %101 = arith.select %98, %99, %100 : vector<8x1xi1>, vector<8x1xf32>
    %102 = vector.extract_strided_slice %27 {offsets = [2, 0], sizes = [1, 2], strides = [1, 1]} : vector<5x2xf32> to vector<1x2xf32>
    %103 = vector.broadcast %101 : vector<8x1xf32> to vector<8x2xf32>
    %104 = vector.broadcast %102 : vector<1x2xf32> to vector<8x2xf32>
    %105 = arith.mulf %103, %104 : vector<8x2xf32>
    %106 = arith.addf %96, %105 : vector<8x2xf32>
    %c3_i32 = arith.constant 3 : i32
    %107 = vector.broadcast %c3_i32 : i32 to vector<8x1xi32>
    %108 = arith.cmpi eq, %4, %107 : vector<8x1xi32>
    %cst_16 = arith.constant 1.000000e+00 : f32
    %cst_17 = arith.constant 0.000000e+00 : f32
    %109 = vector.broadcast %cst_16 : f32 to vector<8x1xf32>
    %110 = vector.broadcast %cst_17 : f32 to vector<8x1xf32>
    %111 = arith.select %108, %109, %110 : vector<8x1xi1>, vector<8x1xf32>
    %112 = vector.extract_strided_slice %27 {offsets = [3, 0], sizes = [1, 2], strides = [1, 1]} : vector<5x2xf32> to vector<1x2xf32>
    %113 = vector.broadcast %111 : vector<8x1xf32> to vector<8x2xf32>
    %114 = vector.broadcast %112 : vector<1x2xf32> to vector<8x2xf32>
    %115 = arith.mulf %113, %114 : vector<8x2xf32>
    %116 = arith.addf %106, %115 : vector<8x2xf32>
    %c4_i32 = arith.constant 4 : i32
    %117 = vector.broadcast %c4_i32 : i32 to vector<8x1xi32>
    %118 = arith.cmpi eq, %4, %117 : vector<8x1xi32>
    %cst_18 = arith.constant 1.000000e+00 : f32
    %cst_19 = arith.constant 0.000000e+00 : f32
    %119 = vector.broadcast %cst_18 : f32 to vector<8x1xf32>
    %120 = vector.broadcast %cst_19 : f32 to vector<8x1xf32>
    %121 = arith.select %118, %119, %120 : vector<8x1xi1>, vector<8x1xf32>
    %122 = vector.extract_strided_slice %27 {offsets = [4, 0], sizes = [1, 2], strides = [1, 1]} : vector<5x2xf32> to vector<1x2xf32>
    %123 = vector.broadcast %121 : vector<8x1xf32> to vector<8x2xf32>
    %124 = vector.broadcast %122 : vector<1x2xf32> to vector<8x2xf32>
    %125 = arith.mulf %123, %124 : vector<8x2xf32>
    %126 = arith.addf %116, %125 : vector<8x2xf32>
    %127 = arith.negf %126 : vector<8x2xf32>
    %128 = math.exp %127 : vector<8x2xf32>
    %cst_20 = arith.constant 1.000000e+00 : f32
    %129 = vector.broadcast %cst_20 : f32 to vector<8x2xf32>
    %130 = arith.addf %129, %128 : vector<8x2xf32>
    %131 = arith.divf %129, %130 : vector<8x2xf32>
    %c0_21 = arith.constant 0 : index
    %c0_22 = arith.constant 0 : index
    %132 = vector.load %arg2[%c0_21, %c0_22] : memref<8x2xf32, #tpu.memory_space<vmem>>, vector<8x2xf32>
    tpu.vector_store %arg2[%c0_21, %c0_22], %131 {strides = array<i32>} : memref<8x2xf32, #tpu.memory_space<vmem>>, vector<8x2xf32>,
    return
  }
}

</mosaic_0001>

<llo_original>
// kernel: actor_forward_discrete.1
$region0: #{actor_forward_discrete.1}
  #allocation0 [shape = 'u32[]', space=smem, size = 0x4, offset = 0x4, fixed_abs, tag = 'smem constant byte address 0x4 - core index']
  #allocation1 [shape = 'u32[144,128]{1,0:T(1,128)}', space=vmem, size = 0x12000, scoped, tag = 'internal scratch']
  %s0 = inlined_call_operand.vmem [shape: f32[8,3], index: 0, kind: input, shape index: {}]
  %s1 = inlined_call_operand.hbm [shape: f32[80,128], index: 1, kind: input, shape index: {}]
  %s2 = inlined_call_operand.vmem [shape: f32[8,2], index: 2, kind: output, shape index: {}]
  %s3 = sld [smem:[#allocation0]]
  $region22: #{actor_forward_discrete.1} parent=0
    _
  %s5 = ssub.s32 1, %s3
  %s6 = scalar_select 0, %s5, %s3
  $region1: #{actor_forward_discrete.1} parent=0
    #allocation2 [shape = 'u8[40960]{0}', space=vmem, size = 0xa000, scoped, tag = 'input window, operand 1, single buffered']
    #allocation3 [shape = 's32[1]{0}', space=sflag, size = 0x4, scoped, tag = 'scoped memory for actor_forward_discrete.1']
    %7 = vsyncpa [#allocation3], 0
    // Predicated region
    $region2: #{actor_forward_discrete.1} parent=1 // pred_check
      _
    $region3: #{actor_forward_discrete.1} parent=1 // pred_check_branch
      %9 = sbr.rel (0) target = $region5
    $region4: #{actor_forward_discrete.1} parent=1 // pred_region
      _
    $region5: #{actor_forward_discrete.1} parent=1 // pred_fallthru
      _
    // Predicated region
    $region6: #{actor_forward_discrete.1} parent=1 // pred_check
      _
    $region7: #{actor_forward_discrete.1} parent=1 // pred_check_branch
      %11 = sbr.rel (0) target = $region9
    $region8: #{actor_forward_discrete.1} parent=1 // pred_region
      %s13 = ssub.s32 1280, 1280
      %14 = vsyncadd [#allocation3], %s13
      %s15 = sshll.u32 [#allocation2], 4
      %s16 = int_to_ptr.vmem [resolvable:$true] %s15
      %21 = dma.hbm_to_vmem [thread:$0]  %s1, 1280, %s16, [#allocation3], 128, 128, 8
    $region9: #{actor_forward_discrete.1} parent=1 // pred_fallthru
      _
    // Predicated region
    $region10: #{actor_forward_discrete.1} parent=1 // pred_check
      _
    $region11: #{actor_forward_discrete.1} parent=1 // pred_check_branch
      %23 = sbr.rel (0) target = $region13
    $region12: #{actor_forward_discrete.1} parent=1 // pred_region
      %24 = dma.done [#allocation3], 1280
    $region13: #{actor_forward_discrete.1} parent=1 // pred_fallthru
      _
    %v25 = vld [vmem:[%s0] sm:$0xff]
    %v26 = vcvt.f32.s32.to.zero.pseudo %v25
    %v27 = vld [vmem:[#allocation2] sm:$0x3]
    %v28 = vld [vmem:[#allocation2 + $0x8] sm:$0x1]
    %30 = vset.pattern.permute.xlu0 0
    %31 = vperm.xlu0 %30, %v25
    %v32 = vpop.permute.xlu0 %31
    %v34 = vlaneseq
    %v35 = vshrl.u32 %v34, 7
    %v36 = vsub.s32 0, %v35
    %v37 = vrot.slane %v27, %v36
    %v38 = vmul.f32 %v32, %v37
    %39 = vset.pattern.permute.xlu0 1
    %40 = vperm.xlu0 %39, %v25
    %v41 = vpop.permute.xlu0 %40
    %v43 = vlaneseq
    %v44 = vshrl.u32 %v43, 7
    %v45 = vsub.s32 1, %v44
    %v46 = vrot.slane %v27, %v45
    %v47 = vmul.f32 %v41, %v46
    %v48 = vadd.f32 %v38, %v47
    %v49 = vlaneseq
    %v50 = vshrl.u32 %v49, 7
    %v51 = vsub.s32 0, %v50
    %v52 = vrot.slane %v28, %v51
    %v53 = vadd.f32 %v48, %v52
    %v54 = vmax.f32 %v53, 0.0
    %v55 = vld [vmem:[#allocation2 + $0x10] sm:$0xff]
    %v56 = vld [vmem:[#allocation2 + $0x18] sm:$0xff]
    %v57 = vld [vmem:[#allocation2 + $0x20] sm:$0xff]
    %v58 = vld [vmem:[#allocation2 + $0x28] sm:$0xff]
    %v59 = vld [vmem:[#allocation2 + $0x30] sm:$0x1]
    %v60 = vlaneseq
    %v61 = vshrl.u32 %v60, 7
    %v62 = vsub.s32 0, %v61
    %v63 = vrot.slane %v59, %v62
    %vm64 = vcmask 261120
    %v66 = vsel %vm64, %v54, 0
    %68 = vmatprep.subr.mxu0 0.0
    %69 = vmatpush1.msra.mxu0 0.0
    %70 = vmatprep.subr.mxu0 0.0
    %71 = vmatpush1.msra.mxu0 0.0
    %72 = vmatprep.subr.mxu0 0.0
    %73 = vmatpush1.msra.mxu0 0.0
    %74 = vmatprep.subr.mxu0 0.0
    %75 = vmatpush1.msra.mxu0 0.0
    %76 = vmatprep.subr.mxu0 0.0
    %77 = vmatpush1.msra.mxu0 0.0
    %78 = vmatprep.subr.mxu0 0.0
    %79 = vmatpush1.msra.mxu0 0.0
    %80 = vmatprep.subr.mxu0 0.0
    %81 = vmatpush1.msra.mxu0 0.0
    %82 = vmatprep.subr.mxu0 0.0
    %83 = vmatpush1.msra.mxu0 0.0
    %84 = vmatprep.subr.mxu0 0.0
    %85 = vmatpush1.msra.mxu0 0.0
    %86 = vmatprep.subr.mxu0 0.0
    %87 = vmatpush1.msra.mxu0 0.0
    %88 = vmatprep.subr.mxu0 0.0
    %89 = vmatpush1.msra.mxu0 0.0
    %90 = vmatprep.subr.mxu0 0.0
    %91 = vmatpush1.msra.mxu0 0.0
    %92 = vmatprep.subr.mxu0 0.0
    %93 = vmatpush1.msra.mxu0 %v58
    %94 = vmatprep.subr.mxu0 0.0
    %95 = vmatpush1.msra.mxu0 %v57
    %96 = vmatprep.subr.mxu0 0.0
    %97 = vmatpush1.msra.mxu0 %v56
    %98 = vmatprep.subr.mxu0 0.0
    %99 = vmatpush1.msra.mxu0 %v55
    %100 = vmatprep.subr.mxu0 0.0
    %101 = vmatpush2.msra.mxu0 0.0
    %102 = vmatprep.subr.mxu0 0.0
    %103 = vmatpush2.msra.mxu0 0.0
    %104 = vmatprep.subr.mxu0 0.0
    %105 = vmatpush2.msra.mxu0 0.0
    %106 = vmatprep.subr.mxu0 0.0
    %107 = vmatpush2.msra.mxu0 0.0
    %108 = vmatprep.subr.mxu0 0.0
    %109 = vmatpush2.msra.mxu0 0.0
    %110 = vmatprep.subr.mxu0 0.0
    %111 = vmatpush2.msra.mxu0 0.0
    %112 = vmatprep.subr.mxu0 0.0
    %113 = vmatpush2.msra.mxu0 0.0
    %114 = vmatprep.subr.mxu0 0.0
    %115 = vmatpush2.msra.mxu0 0.0
    %116 = vmatprep.subr.mxu0 0.0
    %117 = vmatpush2.msra.mxu0 0.0
    %118 = vmatprep.subr.mxu0 0.0
    %119 = vmatpush2.msra.mxu0 0.0
    %120 = vmatprep.subr.mxu0 0.0
    %121 = vmatpush2.msra.mxu0 0.0
    %122 = vmatprep.subr.mxu0 0.0
    %123 = vmatpush2.msra.mxu0 0.0
    %124 = vmatprep.subr.mxu0 0.0
    %125 = vmatpush2.msra.mxu0 0.0
    %126 = vmatprep.subr.mxu0 0.0
    %127 = vmatpush2.msra.mxu0 0.0
    %128 = vmatprep.subr.mxu0 0.0
    %129 = vmatpush2.msra.mxu0 0.0
    %130 = vmatprep.subr.mxu0 0.0
    %131 = vmatpush2.msra.mxu0 0.0
    %132 = vmatprep.mubr.f32.mxu0 0.0
    %133 = vmatmul.mubr.f32.gmra.mxu0 %v66
    %v134 = vpop.f32.mrf.mxu0
    %v135 = vadd.f32 %v63, %v134
    %v136 = vpop.f32.mrf.mxu0
    %137 = vdwg.mxu0
    %v138 = vld [vmem:[#allocation2 + $0x40] sm:$0xff]
    %v139 = vld [vmem:[#allocation2 + $0x48] sm:$0x1]
    %v140 = vld [vmem:[#allocation2 + $0x38] sm:$0x1f]
    %142 = vset.pattern.permute.xlu0 0
    %143 = vperm.xlu0 %142, %v135
    %v144 = vpop.permute.xlu0 %143
    %v146 = vlaneseq
    %v147 = vshrl.u32 %v146, 7
    %v148 = vsub.s32 0, %v147
    %v149 = vrot.slane %v138, %v148
    %v150 = vmul.f32 %v144, %v149
    %v151 = vlaneseq
    %v152 = vshrl.u32 %v151, 7
    %v153 = vsub.s32 0, %v152
    %v154 = vrot.slane %v139, %v153
    %v155 = vadd.f32 %v150, %v154
    %156 = vset.pattern.permute.xlu0 1
    %157 = vperm.xlu0 %156, %v135
    %v158 = vpop.permute.xlu0 %157
    %v160 = vlaneseq
    %v161 = vshrl.u32 %v160, 7
    %v162 = vsub.s32 1, %v161
    %v163 = vrot.slane %v138, %v162
    %v164 = vmul.f32 %v158, %v163
    %v165 = vadd.f32 %v155, %v164
    %166 = vset.pattern.permute.xlu0 2
    %167 = vperm.xlu0 %166, %v135
    %v168 = vpop.permute.xlu0 %167
    %v170 = vlaneseq
    %v171 = vshrl.u32 %v170, 7
    %v172 = vsub.s32 2, %v171
    %v173 = vrot.slane %v138, %v172
    %v174 = vmul.f32 %v168, %v173
    %v175 = vadd.f32 %v165, %v174
    %176 = vset.pattern.permute.xlu0 3
    %177 = vperm.xlu0 %176, %v135
    %v178 = vpop.permute.xlu0 %177
    %v180 = vlaneseq
    %v181 = vshrl.u32 %v180, 7
    %v182 = vsub.s32 3, %v181
    %v183 = vrot.slane %v138, %v182
    %v184 = vmul.f32 %v178, %v183
    %v185 = vadd.f32 %v175, %v184
    %186 = vset.pattern.permute.xlu0 4
    %187 = vperm.xlu0 %186, %v135
    %v188 = vpop.permute.xlu0 %187
    %v190 = vlaneseq
    %v191 = vshrl.u32 %v190, 7
    %v192 = vsub.s32 4, %v191
    %v193 = vrot.slane %v138, %v192
    %v194 = vmul.f32 %v188, %v193
    %v195 = vadd.f32 %v185, %v194
    %196 = vset.pattern.permute.xlu0 5
    %197 = vperm.xlu0 %196, %v135
    %v198 = vpop.permute.xlu0 %197
    %v200 = vlaneseq
    %v201 = vshrl.u32 %v200, 7
    %v202 = vsub.s32 5, %v201
    %v203 = vrot.slane %v138, %v202
    %v204 = vmul.f32 %v198, %v203
    %v205 = vadd.f32 %v195, %v204
    %206 = vset.pattern.permute.xlu0 6
    %207 = vperm.xlu0 %206, %v135
    %v208 = vpop.permute.xlu0 %207
    %v210 = vlaneseq
    %v211 = vshrl.u32 %v210, 7
    %v212 = vsub.s32 6, %v211
    %v213 = vrot.slane %v138, %v212
    %v214 = vmul.f32 %v208, %v213
    %v215 = vadd.f32 %v205, %v214
    %216 = vset.pattern.permute.xlu0 7
    %217 = vperm.xlu0 %216, %v135
    %v218 = vpop.permute.xlu0 %217
    %v220 = vlaneseq
    %v221 = vshrl.u32 %v220, 7
    %v222 = vsub.s32 7, %v221
    %v223 = vrot.slane %v138, %v222
    %v224 = vmul.f32 %v218, %v223
    %v225 = vadd.f32 %v215, %v224
    %vm226 = vcmp.eq.s32.totalorder %v26, 0
    %v227 = vsel %vm226, 1.0, 0.0
    %229 = vset.pattern.permute.xlu0 2
    %230 = vperm.xlu0 %229, %v227
    %v231 = vpop.permute.xlu0 %230
    %v233 = vlaneseq
    %v234 = vshrl.u32 %v233, 7
    %v235 = vsub.s32 0, %v234
    %v236 = vrot.slane %v140, %v235
    %v237 = vmul.f32 %v231, %v236
    %v238 = vadd.f32 %v225, %v237
    %vm239 = vcmp.eq.s32.totalorder %v26, 1
    %v240 = vsel %vm239, 1.0, 0.0
    %242 = vset.pattern.permute.xlu0 2
    %243 = vperm.xlu0 %242, %v240
    %v244 = vpop.permute.xlu0 %243
    %v246 = vlaneseq
    %v247 = vshrl.u32 %v246, 7
    %v248 = vsub.s32 1, %v247
    %v249 = vrot.slane %v140, %v248
    %v250 = vmul.f32 %v244, %v249
    %v251 = vadd.f32 %v238, %v250
    %vm252 = vcmp.eq.s32.totalorder %v26, 2
    %v253 = vsel %vm252, 1.0, 0.0
    %255 = vset.pattern.permute.xlu0 2
    %256 = vperm.xlu0 %255, %v253
    %v257 = vpop.permute.xlu0 %256
    %v259 = vlaneseq
    %v260 = vshrl.u32 %v259, 7
    %v261 = vsub.s32 2, %v260
    %v262 = vrot.slane %v140, %v261
    %v263 = vmul.f32 %v257, %v262
    %v264 = vadd.f32 %v251, %v263
    %vm265 = vcmp.eq.s32.totalorder %v26, 3
    %v266 = vsel %vm265, 1.0, 0.0
    %268 = vset.pattern.permute.xlu0 2
    %269 = vperm.xlu0 %268, %v266
    %v270 = vpop.permute.xlu0 %269
    %v272 = vlaneseq
    %v273 = vshrl.u32 %v272, 7
    %v274 = vsub.s32 3, %v273
    %v275 = vrot.slane %v140, %v274
    %v276 = vmul.f32 %v270, %v275
    %v277 = vadd.f32 %v264, %v276
    %vm278 = vcmp.eq.s32.totalorder %v26, 4
    %v279 = vsel %vm278, 1.0, 0.0
    %281 = vset.pattern.permute.xlu0 2
    %282 = vperm.xlu0 %281, %v279
    %v283 = vpop.permute.xlu0 %282
    %v285 = vlaneseq
    %v286 = vshrl.u32 %v285, 7
    %v287 = vsub.s32 4, %v286
    %v288 = vrot.slane %v140, %v287
    %v289 = vmul.f32 %v283, %v288
    %v290 = vadd.f32 %v277, %v289
    %v291 = vxor.u32 %v290, 2147483648
    %v292 = vmul.f32 %v291, 1.442695
    %v293 = vpow.pop %v292
    %v294 = vadd.f32 %v293, 1.0
    %v295 = vrcp.pop %v294
    %v296 = vmul.f32 1.0, %v295
    %vm297 = vcmask 15360
    %298 = vst.msk [vmem:[%s2] sm:$0xff] %vm297, %v296
    // Predicated region
    $region14: #{actor_forward_discrete.1} parent=1 // pred_check
      _
    $region15: #{actor_forward_discrete.1} parent=1 // pred_check_branch
      %300 = sbr.rel (0) target = $region17
    $region16: #{actor_forward_discrete.1} parent=1 // pred_region
      _
    $region17: #{actor_forward_discrete.1} parent=1 // pred_fallthru
      _
    // Predicated region
    $region18: #{actor_forward_discrete.1} parent=1 // pred_check
      _
    $region19: #{actor_forward_discrete.1} parent=1 // pred_check_branch
      %302 = sbr.rel (0) target = $region21
    $region20: #{actor_forward_discrete.1} parent=1 // pred_region
      _
    $region21: #{actor_forward_discrete.1} parent=1 // pred_fallthru
      _
    %303 = vsyncpa [#allocation3], 1

</llo_original>
